<compile_context>
chip_gen: v7x
topology: tpu7x:2x2x1
jax: 0.10.0
libtpu: 0.0.40
codegen_flags: <defaults>
</compile_context>

<pallas_src>
import functools
import math
from typing import NamedTuple

import jax
import jax.numpy as jnp
from jax.experimental import pallas as pl
from jax.experimental.pallas import tpu as pltpu

EPS = 1e-5
_MIB = 1024 * 1024


def _round_up(x, m):
    return ((x + m - 1) // m) * m


def _pad_to(a, shape):
    pads = [(0, s - d) for d, s in zip(a.shape, shape)]
    if all(p == (0, 0) for p in pads):
        return a
    return jnp.pad(a, pads)


# ---------------------------------------------------------------------------
# Hardware introspection (safe fallbacks everywhere).
# ---------------------------------------------------------------------------
def _device_kind():
    try:
        return jax.devices()[0].device_kind.lower()
    except Exception:
        return ""


def _vmem_capacity_bytes():
    try:
        cap = int(pltpu.get_tpu_info().vmem_capacity_bytes)
        if cap > 0:
            return cap
    except Exception:
        pass
    return 64 * _MIB if "v7" in _device_kind() else 128 * _MIB


def _mxu_align():
    kind = _device_kind()
    return 256 if ("v6" in kind or "v7" in kind) else 128


def _num_tensorcores():
    # v7x has 2 TensorCores per chip (megacore); v5e/v6e have 1.
    return 2 if "v7" in _device_kind() else 1


# ---------------------------------------------------------------------------
# VMEM footprint estimate (drives hidden-dim tiling + vmem_limit).
# ---------------------------------------------------------------------------
def _vmem_estimate(tm, din, th, dout_pad, num_h, w_bytes):
    io_bytes = 4  # conservative: f32 activations / outputs
    est = 0
    est += 2 * tm * din * io_bytes            # x tile (double buffered)
    est += 2 * tm * dout_pad * io_bytes       # output tile (double buffered)
    est += 2 * din * (2 * th) * w_bytes       # fused W_in|W_gate block
    est += 2 * (2 * th) * 4                   # fused b_in|b_gate block (f32)
    est += 2 * th * dout_pad * w_bytes        # W_out block
    est += 2 * dout_pad * 4                   # b_out
    est += 4 * din * 4                        # LayerNorm weight / bias
    est += 2 * tm * din * 4                   # f32 LayerNorm temporaries (x, xn)
    est += 2 * tm * (2 * th) * 4              # f32 hg temp + h/g/y headroom
    if num_h > 1:
        est += tm * din * w_bytes             # cached xn scratch
        est += tm * dout_pad * 4              # f32 accumulator scratch
    return est


# ---------------------------------------------------------------------------
# One-time parameter packing (pay the HBM transpose/pad/cast once, not per call).
# ---------------------------------------------------------------------------
class PackedMLPParams(NamedTuple):
    w_norm: jax.Array   # (1, Din)              f32
    b_norm: jax.Array   # (1, Din)              f32
    w12: jax.Array      # (num_h, Din, 2*th)    compute dtype
    b12: jax.Array      # (num_h, 1, 2*th)      f32
    w_out: jax.Array    # (num_h, th, Dout_pad) compute dtype
    b_out: jax.Array    # (1, Dout_pad)         f32


class MLPConfig(NamedTuple):
    din: int
    hidden: int
    dout: int
    num_h: int
    th: int
    dout_pad: int
    tm: int
    compute_dtype: str
    vmem_limit_bytes: int
    num_cores: int


def mlp_prepack(params, *, tm=None, compute_dtype=jnp.bfloat16,
                vmem_budget_bytes=None):
    """Pack raw MLP params into MXU-ready blocks + a static launch config."""
    w_norm, b_norm, w_in, b_in, w_gate, b_gate, w_out, b_out = params
    H, Din = w_in.shape
    Dout = w_out.shape[0]

    cap = _vmem_capacity_bytes()
    align = _mxu_align()
    ncores = _num_tensorcores()

    if vmem_budget_bytes is None:
        # ~96 MiB of the 128-MiB parts (v5e/v6e); ~44 MiB on v7x (64 MiB/TC).
        vmem_budget_bytes = 96 * _MIB if cap > 64 * _MIB else 44 * _MIB
    if tm is None:
        tm = 256

    dout_pad = _round_up(Dout, align)
    w_bytes = jnp.dtype(compute_dtype).itemsize

    def _select(tm_sel):
        num_h = 1
        while True:
            h_pad = _round_up(H, align * num_h)
            th = h_pad // num_h
            est = _vmem_estimate(tm_sel, Din, th, dout_pad, num_h, w_bytes)
            if est <= vmem_budget_bytes or th <= align:
                return num_h, th, h_pad, est
            num_h += 1

    num_h, th, H_pad, est = _select(tm)
    # If weights must be re-streamed per M tile anyway (num_h > 1), a bigger
    # M tile on v7x keeps the restream firmly MXU-bound.
    if num_h > 1 and cap <= 64 * _MIB and tm < 512:
        tm = 512
        num_h, th, H_pad, est = _select(tm)

    vmem_limit = int(max(32 * _MIB, est + 4 * _MIB))
    vmem_limit = int(min(vmem_limit, cap - 8 * _MIB))

    # ---- fuse / pad / cast the weights (one-time cost) ----
    w_in_t = _pad_to(w_in.swapaxes(0, 1), (Din, H_pad))          # (Din, H_pad)
    w_gate_t = _pad_to(w_gate.swapaxes(0, 1), (Din, H_pad))      # (Din, H_pad)
    w12 = jnp.concatenate([w_in_t.reshape(Din, num_h, th),
                           w_gate_t.reshape(Din, num_h, th)], axis=-1)
    w12 = jnp.transpose(w12, (1, 0, 2)).astype(compute_dtype)    # (num_h, Din, 2*th)

    b12 = jnp.concatenate([_pad_to(b_in, (H_pad,)).reshape(num_h, 1, th),
                           _pad_to(b_gate, (H_pad,)).reshape(num_h, 1, th)],
                          axis=-1).astype(jnp.float32)           # (num_h, 1, 2*th)

    w_out_p = _pad_to(w_out.swapaxes(0, 1), (H_pad, dout_pad))
    w_out_p = w_out_p.reshape(num_h, th, dout_pad).astype(compute_dtype)
    b_out_p = _pad_to(b_out, (dout_pad,)).reshape(1, dout_pad).astype(jnp.float32)

    w_norm_p = w_norm.reshape(1, Din).astype(jnp.float32)
    b_norm_p = b_norm.reshape(1, Din).astype(jnp.float32)

    # TODO(synk): optional fp8 weight path for v7x (halves weight VMEM/HBM traffic).
    packed = PackedMLPParams(w_norm_p, b_norm_p, w12, b12, w_out_p, b_out_p)
    config = MLPConfig(Din, H, Dout, num_h, th, dout_pad, tm,
                       jnp.dtype(compute_dtype).name, vmem_limit, ncores)
    return packed, config


# ---------------------------------------------------------------------------
# Kernels.
# ---------------------------------------------------------------------------
def _make_mlp_kernel_single(h_split, compute_dtype):
    """num_h == 1 fast path: weights resident, direct output store, no scratch."""
    def kernel(x_ref, wn_ref, bn_ref, w12_ref, b12_ref, wout_ref, bout_ref, o_ref):
        # LayerNorm over the last dim, in f32.
        x = x_ref[...].astype(jnp.float32)
        mean = jnp.mean(x, axis=-1, keepdims=True)
        var = jnp.mean(jnp.square(x - mean), axis=-1, keepdims=True)
        xn = (x - mean) * jax.lax.rsqrt(var + EPS)
        xn = (xn * wn_ref[...] + bn_ref[...]).astype(compute_dtype)

        # Fused in/gate matmul: one MXU pass over the (Din, 2*th) weight block.
        hg = jnp.dot(xn, w12_ref[0], preferred_element_type=jnp.float32)
        hg = hg + b12_ref[0]
        h = jnp.square(jnp.maximum(hg[:, :h_split], 0.0))        # squared ReLU
        g = jax.nn.sigmoid(hg[:, h_split:])                      # sigmoid gate
        y = (h * g).astype(compute_dtype)
        # TODO(synk): dropout with training=True / p>0 needs pltpu.prng_* masking;
        #             module default (dropout=0.0, eval) is an identity.
        o_ref[...] = (jnp.dot(y, wout_ref[0], preferred_element_type=jnp.float32)
                      + bout_ref[...]).astype(o_ref.dtype)

    return kernel


def _make_mlp_kernel_multi(h_split, compute_dtype):
    """num_h > 1: hidden dim tiled on the trailing ("arbitrary") grid axis."""
    def kernel(x_ref, wn_ref, bn_ref, w12_ref, b12_ref, wout_ref, bout_ref,
               o_ref, xn_ref, acc_ref):
        h_idx = pl.program_id(1)

        @pl.when(h_idx == 0)
        def _init():
            x = x_ref[...].astype(jnp.float32)
            mean = jnp.mean(x, axis=-1, keepdims=True)
            var = jnp.mean(jnp.square(x - mean), axis=-1, keepdims=True)
            xn = (x - mean) * jax.lax.rsqrt(var + EPS)
            xn = xn * wn_ref[...] + bn_ref[...]
            xn_ref[...] = xn.astype(xn_ref.dtype)
            acc_ref[...] = jnp.zeros_like(acc_ref)

        xn = xn_ref[...]                                          # (tm, Din)

        hg = jnp.dot(xn, w12_ref[0], preferred_element_type=jnp.float32)
        hg = hg + b12_ref[0]
        h = jnp.square(jnp.maximum(hg[:, :h_split], 0.0))         # squared ReLU
        g = jax.nn.sigmoid(hg[:, h_split:])                       # sigmoid gate
        y = (h * g).astype(compute_dtype)
        # TODO(synk): chunk this matmul's N dim (512-1024 lanes per chunk) to
        #             shrink the live f32 hg temporary when th is very large.
        acc_ref[...] += jnp.dot(y, wout_ref[0], preferred_element_type=jnp.float32)

        @pl.when(h_idx == pl.num_programs(1) - 1)
        def _finalize():
            o_ref[...] = (acc_ref[...] + bout_ref[...]).astype(o_ref.dtype)

    return kernel


# ---------------------------------------------------------------------------
# Launch wrapper.
# ---------------------------------------------------------------------------
@functools.partial(jax.jit, static_argnames=("config",))
def mlp_pallas_packed(x, packed: PackedMLPParams, config: MLPConfig):
    """x: [..., Din] -> [..., Dout], using pre-packed weights."""
    Din, Dout = config.din, config.dout
    num_h, th, dout_pad = config.num_h, config.th, config.dout_pad
    compute_dtype = jnp.dtype(config.compute_dtype)

    lead = x.shape[:-1]
    M = math.prod(lead) if lead else 1
    x2 = x.reshape(M, Din)

    # ---- M tiling: big tiles for MXU occupancy; keep >= num_cores balanced
    #      tiles so v7x's two TensorCores both get work on the "parallel" axis.
    tm_cap = config.tm
    if config.num_cores > 1 and M > 8:
        tm_cap = min(tm_cap, _round_up(pl.cdiv(M, config.num_cores), 8))
    tm_eff = max(8, min(_round_up(M, 8), _round_up(tm_cap, 8)))
    M_pad = _round_up(M, tm_eff)
    m_tiles = M_pad // tm_eff

    x_p = _pad_to(x2, (M_pad, Din))

    compiler_params = pltpu.CompilerParams(
        dimension_semantics=(("parallel",) if num_h == 1
                             else ("parallel", "arbitrary")),
        vmem_limit_bytes=config.vmem_limit_bytes,
    )

    if num_h == 1:
        grid = (m_tiles,)
        const2 = lambda i: (0, 0)
        const3 = lambda i: (0, 0, 0)
        in_specs = [
            pl.BlockSpec((tm_eff, Din), lambda i: (i, 0)),        # x tile
            pl.BlockSpec((1, Din), const2),                       # w_norm
            pl.BlockSpec((1, Din), const2),                       # b_norm
            # TODO(synk): pipeline_mode=pl.Buffered(1) on these grid-invariant
            #             blocks would halve the resident weight VMEM footprint.
            pl.BlockSpec((1, Din, 2 * th), const3),               # fused W_in|W_gate
            pl.BlockSpec((1, 1, 2 * th), const3),                 # fused b_in|b_gate
            pl.BlockSpec((1, th, dout_pad), const3),              # W_out
            pl.BlockSpec((1, dout_pad), const2),                  # b_out
        ]
        out_specs = pl.BlockSpec((tm_eff, dout_pad), lambda i: (i, 0))
        kernel = _make_mlp_kernel_single(th, compute_dtype)
        scratch = []
    else:
        grid = (m_tiles, num_h)
        const2 = lambda i, h: (0, 0)
        htile3 = lambda i, h: (h, 0, 0)
        in_specs = [
            pl.BlockSpec((tm_eff, Din), lambda i, h: (i, 0)),     # x tile
            pl.BlockSpec((1, Din), const2),                       # w_norm
            pl.BlockSpec((1, Din), const2),                       # b_norm
            pl.BlockSpec((1, Din, 2 * th), htile3),               # fused W_in|W_gate
            pl.BlockSpec((1, 1, 2 * th), htile3),                 # fused b_in|b_gate
            pl.BlockSpec((1, th, dout_pad), htile3),              # W_out block
            pl.BlockSpec((1, dout_pad), const2),                  # b_out
        ]
        out_specs = pl.BlockSpec((tm_eff, dout_pad), lambda i, h: (i, 0))
        kernel = _make_mlp_kernel_multi(th, compute_dtype)
        scratch = [pltpu.VMEM((tm_eff, Din), compute_dtype),      # cached xn
                   pltpu.VMEM((tm_eff, dout_pad), jnp.float32)]   # f32 accumulator

    out = pl.pallas_call(
        kernel,
        out_shape=jax.ShapeDtypeStruct((M_pad, dout_pad), x.dtype),
        grid_spec=pltpu.PrefetchScalarGridSpec(
            num_scalar_prefetch=0,
            grid=grid,
            in_specs=in_specs,
            out_specs=out_specs,
            scratch_shapes=scratch,
        ),
        compiler_params=compiler_params,
    )(x_p, packed.w_norm, packed.b_norm, packed.w12, packed.b12,
      packed.w_out, packed.b_out)

    return out[:M, :Dout].reshape(*lead, Dout)


def mlp_pallas(x, params, *, tm=None, compute_dtype=jnp.bfloat16,
               vmem_budget_bytes=None):
    """Convenience wrapper: prepack (one-time cost) + launch."""
    packed, config = mlp_prepack(params, tm=tm, compute_dtype=compute_dtype,
                                 vmem_budget_bytes=vmem_budget_bytes)
    return mlp_pallas_packed(x, packed, config)


# ---------------------------------------------------------------------------
# Reference + param init.
# ---------------------------------------------------------------------------
def _xavier_uniform(key, shape):
    fan_out, fan_in = shape
    limit = (6.0 / (fan_in + fan_out)) ** 0.5
    return jax.random.uniform(key, shape, jnp.float32, -limit, limit)


def make_params(key, in_features, hidden_features, out_features):
    k1, k2, k3 = jax.random.split(key, 3)
    w_in = _xavier_uniform(k1, (hidden_features, in_features))
    w_gate = _xavier_uniform(k2, (hidden_features, in_features))
    w_out = _xavier_uniform(k3, (out_features, hidden_features))
    b_in = jnp.zeros((hidden_features,), jnp.float32)
    b_gate = jnp.zeros((hidden_features,), jnp.float32)
    b_out = jnp.zeros((out_features,), jnp.float32)
    w_norm = jnp.ones((in_features,), jnp.float32)
    b_norm = jnp.zeros((in_features,), jnp.float32)
    return (w_norm, b_norm, w_in, b_in, w_gate, b_gate, w_out, b_out)


def mlp_reference(x, params):
    """Pure-JAX reference mirroring mlp_forward (dropout=0, eval)."""
    w_norm, b_norm, w_in, b_in, w_gate, b_gate, w_out, b_out = params
    mean = jnp.mean(x, axis=-1, keepdims=True)
    var = jnp.mean(jnp.square(x - mean), axis=-1, keepdims=True)
    xn = (x - mean) / jnp.sqrt(var + EPS) * w_norm + b_norm
    y = xn @ w_in.T + b_in
    y = jnp.square(jnp.maximum(y, 0.0))
    gate = jax.nn.sigmoid(xn @ w_gate.T + b_gate)
    y = y * gate
    return y @ w_out.T + b_out


if __name__ == "__main__":
    key = jax.random.PRNGKey(0)
    kx, kp, kp2 = jax.random.split(key, 3)

    batch, seq = 2, 8
    in_features, hidden_features, out_features = 32, 64, 32

    x = jax.random.normal(kx, (batch, seq, in_features), jnp.float32)
    params = make_params(kp, in_features, hidden_features, out_features)
    ref = mlp_reference(x, params)

    # Pre-packed weights (one-time cost), f32 compute path: tight check.
    packed_f32, cfg_f32 = mlp_prepack(params, compute_dtype=jnp.float32)
    out_f32 = jax.block_until_ready(mlp_pallas_packed(x, packed_f32, cfg_f32))
    assert out_f32.shape == (batch, seq, out_features)
    assert jnp.allclose(out_f32, ref, atol=1e-5, rtol=1e-5), "f32 mismatch vs reference"

    # Default bf16-weight path (MXU-native inputs, f32 accumulation).
    packed_bf16, cfg_bf16 = mlp_prepack(params)
    out_bf16 = jax.block_until_ready(mlp_pallas_packed(x, packed_bf16, cfg_bf16))
    assert out_bf16.shape == (batch, seq, out_features)
    assert float(jnp.max(jnp.abs(out_bf16 - ref))) < 5e-2, "bf16 mismatch vs reference"

    # Force the hidden-dim-tiled (num_h > 1) accumulator path with a larger
    # hidden size and a deliberately tiny VMEM budget, to exercise that kernel.
    hidden_big = 512
    params_big = make_params(kp2, in_features, hidden_big, out_features)
    ref_big = mlp_reference(x, params_big)
    packed_h, cfg_h = mlp_prepack(params_big, compute_dtype=jnp.float32,
                                  vmem_budget_bytes=1)
    assert cfg_h.num_h > 1, "expected multi-h tiling in forced-split test"
    out_h = jax.block_until_ready(mlp_pallas_packed(x, packed_h, cfg_h))
    assert jnp.allclose(out_h, ref_big, atol=1e-3, rtol=1e-3), "num_h>1 mismatch"

    print("KERNEL_OK")
</pallas_src>

<mosaic_0001>
module attributes {stable_mosaic.version = 11 : i64} {
  func.func @kernel(%arg0: i32, %arg1: memref<16x32xf32, #tpu.memory_space<vmem>>, %arg2: memref<1x32xf32, #tpu.memory_space<vmem>>, %arg3: memref<1x32xf32, #tpu.memory_space<vmem>>, %arg4: memref<1x32x256xf32, #tpu.memory_space<vmem>>, %arg5: memref<1x1x256xf32, #tpu.memory_space<vmem>>, %arg6: memref<1x128x128xf32, #tpu.memory_space<vmem>>, %arg7: memref<1x128xf32, #tpu.memory_space<vmem>>, %arg8: memref<16x128xf32, #tpu.memory_space<vmem>>) attributes {dimension_semantics = [#tpu.dimension_semantics<parallel>], iteration_bounds = array<i64: 1>, scalar_prefetch = 0 : i64, scratch_operands = 0 : i64, tpu.core_type = #tpu.core_type<tc>, window_params = [{transform_indices = @transform_0, window_bounds = array<i64: 16, 32>}, {pipeline_mode = #tpu.pipeline_mode<synchronous>, transform_indices = @transform_1, window_bounds = array<i64: 1, 32>}, {pipeline_mode = #tpu.pipeline_mode<synchronous>, transform_indices = @transform_2, window_bounds = array<i64: 1, 32>}, {pipeline_mode = #tpu.pipeline_mode<synchronous>, transform_indices = @transform_3, window_bounds = array<i64: 1, 32, 256>}, {pipeline_mode = #tpu.pipeline_mode<synchronous>, transform_indices = @transform_4, window_bounds = array<i64: 1, 1, 256>}, {pipeline_mode = #tpu.pipeline_mode<synchronous>, transform_indices = @transform_5, window_bounds = array<i64: 1, 128, 128>}, {pipeline_mode = #tpu.pipeline_mode<synchronous>, transform_indices = @transform_6, window_bounds = array<i64: 1, 128>}, {transform_indices = @transform_7, window_bounds = array<i64: 16, 128>}]} {
    %c0 = arith.constant 0 : index
    %c0_0 = arith.constant 0 : index
    %0 = vector.load %arg1[%c0, %c0_0] : memref<16x32xf32, #tpu.memory_space<vmem>>, vector<16x32xf32>
    %cst = arith.constant dense<0.000000e+00> : vector<16xf32>
    %1 = vector.multi_reduction <add>, %0, %cst [1] : vector<16x32xf32> to vector<16xf32>
    %2 = vector.shape_cast %1 : vector<16xf32> to vector<16x1xf32>
    %cst_1 = arith.constant 3.200000e+01 : f32
    %3 = vector.broadcast %cst_1 : f32 to vector<16x1xf32>
    %4 = arith.divf %2, %3 : vector<16x1xf32>
    %5 = vector.broadcast %4 : vector<16x1xf32> to vector<16x32xf32>
    %6 = arith.subf %0, %5 : vector<16x32xf32>
    %7 = arith.mulf %6, %6 : vector<16x32xf32>
    %cst_2 = arith.constant dense<0.000000e+00> : vector<16xf32>
    %8 = vector.multi_reduction <add>, %7, %cst_2 [1] : vector<16x32xf32> to vector<16xf32>
    %9 = vector.shape_cast %8 : vector<16xf32> to vector<16x1xf32>
    %cst_3 = arith.constant 3.200000e+01 : f32
    %10 = vector.broadcast %cst_3 : f32 to vector<16x1xf32>
    %11 = arith.divf %9, %10 : vector<16x1xf32>
    %12 = vector.broadcast %4 : vector<16x1xf32> to vector<16x32xf32>
    %13 = arith.subf %0, %12 : vector<16x32xf32>
    %cst_4 = arith.constant 9.99999974E-6 : f32
    %14 = vector.broadcast %cst_4 : f32 to vector<16x1xf32>
    %15 = arith.addf %11, %14 : vector<16x1xf32>
    %16 = math.rsqrt %15 : vector<16x1xf32>
    %17 = vector.broadcast %16 : vector<16x1xf32> to vector<16x32xf32>
    %18 = arith.mulf %13, %17 : vector<16x32xf32>
    %c0_5 = arith.constant 0 : index
    %c0_6 = arith.constant 0 : index
    %19 = vector.load %arg2[%c0_5, %c0_6] : memref<1x32xf32, #tpu.memory_space<vmem>>, vector<1x32xf32>
    %20 = vector.broadcast %19 : vector<1x32xf32> to vector<16x32xf32>
    %21 = arith.mulf %18, %20 : vector<16x32xf32>
    %c0_7 = arith.constant 0 : index
    %c0_8 = arith.constant 0 : index
    %22 = vector.load %arg3[%c0_7, %c0_8] : memref<1x32xf32, #tpu.memory_space<vmem>>, vector<1x32xf32>
    %23 = vector.broadcast %22 : vector<1x32xf32> to vector<16x32xf32>
    %24 = arith.addf %21, %23 : vector<16x32xf32>
    %c0_9 = arith.constant 0 : index
    %c0_10 = arith.constant 0 : index
    %c0_11 = arith.constant 0 : index
    %25 = vector.load %arg4[%c0_9, %c0_10, %c0_11] : memref<1x32x256xf32, #tpu.memory_space<vmem>>, vector<1x32x256xf32>
    %26 = vector.shape_cast %25 : vector<1x32x256xf32> to vector<32x256xf32>
    %cst_12 = arith.constant dense<0.000000e+00> : vector<16x256xf32>
    %27 = tpu.matmul %24, %26, %cst_12 {dimension_numbers = #tpu.dot_dimension_numbers<[1], [0], [0], [1], [0, 0, 1, 1], [], []>} : vector<16x32xf32>, vector<32x256xf32>, vector<16x256xf32> -> vector<16x256xf32>
    %c0_13 = arith.constant 0 : index
    %c0_14 = arith.constant 0 : index
    %c0_15 = arith.constant 0 : index
    %28 = vector.load %arg5[%c0_13, %c0_14, %c0_15] : memref<1x1x256xf32, #tpu.memory_space<vmem>>, vector<1x1x256xf32>
    %29 = vector.shape_cast %28 : vector<1x1x256xf32> to vector<1x256xf32>
    %30 = vector.broadcast %29 : vector<1x256xf32> to vector<16x256xf32>
    %31 = arith.addf %27, %30 : vector<16x256xf32>
    %32 = vector.extract_strided_slice %31 {offsets = [0, 0], sizes = [16, 128], strides = [1, 1]} : vector<16x256xf32> to vector<16x128xf32>
    %cst_16 = arith.constant 0.000000e+00 : f32
    %33 = vector.broadcast %cst_16 : f32 to vector<16x128xf32>
    %34 = arith.maximumf %32, %33 : vector<16x128xf32>
    %35 = arith.mulf %34, %34 : vector<16x128xf32>
    %36 = vector.extract_strided_slice %31 {offsets = [0, 128], sizes = [16, 128], strides = [1, 1]} : vector<16x256xf32> to vector<16x128xf32>
    %37 = arith.negf %36 : vector<16x128xf32>
    %38 = math.exp %37 : vector<16x128xf32>
    %cst_17 = arith.constant 1.000000e+00 : f32
    %39 = vector.broadcast %cst_17 : f32 to vector<16x128xf32>
    %40 = arith.addf %39, %38 : vector<16x128xf32>
    %41 = arith.divf %39, %40 : vector<16x128xf32>
    %42 = arith.mulf %35, %41 : vector<16x128xf32>
    %c0_18 = arith.constant 0 : index
    %c0_19 = arith.constant 0 : index
    %c0_20 = arith.constant 0 : index
    %43 = vector.load %arg6[%c0_18, %c0_19, %c0_20] : memref<1x128x128xf32, #tpu.memory_space<vmem>>, vector<1x128x128xf32>
    %44 = vector.shape_cast %43 : vector<1x128x128xf32> to vector<128x128xf32>
    %cst_21 = arith.constant dense<0.000000e+00> : vector<16x128xf32>
    %45 = tpu.matmul %42, %44, %cst_21 {dimension_numbers = #tpu.dot_dimension_numbers<[1], [0], [0], [1], [0, 0, 1, 1], [], []>} : vector<16x128xf32>, vector<128x128xf32>, vector<16x128xf32> -> vector<16x128xf32>
    %c0_22 = arith.constant 0 : index
    %c0_23 = arith.constant 0 : index
    %46 = vector.load %arg7[%c0_22, %c0_23] : memref<1x128xf32, #tpu.memory_space<vmem>>, vector<1x128xf32>
    %47 = vector.broadcast %46 : vector<1x128xf32> to vector<16x128xf32>
    %48 = arith.addf %45, %47 : vector<16x128xf32>
    %c0_24 = arith.constant 0 : index
    %c0_25 = arith.constant 0 : index
    %49 = vector.load %arg8[%c0_24, %c0_25] : memref<16x128xf32, #tpu.memory_space<vmem>>, vector<16x128xf32>
    tpu.vector_store %arg8[%c0_24, %c0_25], %48 {strides = array<i32>} : memref<16x128xf32, #tpu.memory_space<vmem>>, vector<16x128xf32>,
    return
  }
  func.func @transform_0(%arg0: i32) -> (i32, i32) {
    %c0_i32 = arith.constant 0 : i32
    %c0_i32_0 = arith.constant 0 : i32
    return %arg0, %c0_i32 : i32, i32
  }
  func.func @transform_1(%arg0: i32) -> (i32, i32) {
    %c0_i32 = arith.constant 0 : i32
    %c0_i32_0 = arith.constant 0 : i32
    %c0_i32_1 = arith.constant 0 : i32
    return %c0_i32, %c0_i32_0 : i32, i32
  }
  func.func @transform_2(%arg0: i32) -> (i32, i32) {
    %c0_i32 = arith.constant 0 : i32
    %c0_i32_0 = arith.constant 0 : i32
    %c0_i32_1 = arith.constant 0 : i32
    return %c0_i32, %c0_i32_0 : i32, i32
  }
  func.func @transform_3(%arg0: i32) -> (i32, i32, i32) {
    %c0_i32 = arith.constant 0 : i32
    %c0_i32_0 = arith.constant 0 : i32
    %c0_i32_1 = arith.constant 0 : i32
    %c0_i32_2 = arith.constant 0 : i32
    return %c0_i32, %c0_i32_0, %c0_i32_1 : i32, i32, i32
  }
  func.func @transform_4(%arg0: i32) -> (i32, i32, i32) {
    %c0_i32 = arith.constant 0 : i32
    %c0_i32_0 = arith.constant 0 : i32
    %c0_i32_1 = arith.constant 0 : i32
    %c0_i32_2 = arith.constant 0 : i32
    return %c0_i32, %c0_i32_0, %c0_i32_1 : i32, i32, i32
  }
  func.func @transform_5(%arg0: i32) -> (i32, i32, i32) {
    %c0_i32 = arith.constant 0 : i32
    %c0_i32_0 = arith.constant 0 : i32
    %c0_i32_1 = arith.constant 0 : i32
    %c0_i32_2 = arith.constant 0 : i32
    return %c0_i32, %c0_i32_0, %c0_i32_1 : i32, i32, i32
  }
  func.func @transform_6(%arg0: i32) -> (i32, i32) {
    %c0_i32 = arith.constant 0 : i32
    %c0_i32_0 = arith.constant 0 : i32
    %c0_i32_1 = arith.constant 0 : i32
    return %c0_i32, %c0_i32_0 : i32, i32
  }
  func.func @transform_7(%arg0: i32) -> (i32, i32) {
    %c0_i32 = arith.constant 0 : i32
    %c0_i32_0 = arith.constant 0 : i32
    return %arg0, %c0_i32 : i32, i32
  }
}

</mosaic_0001>

<llo_original>
// kernel: mlp_pallas_packed.1
$region0: #{mlp_pallas_packed.1}
  #allocation0 [shape = 'u32[]', space=smem, size = 0x4, offset = 0x4, fixed_abs, tag = 'smem constant byte address 0x4 - core index']
  #allocation1 [shape = 'u32[144,128]{1,0:T(1,128)}', space=vmem, size = 0x12000, scoped, tag = 'internal scratch']
  %s0 = inlined_call_operand.hbm [shape: f32[16,32], index: 0, kind: input, shape index: {}]
  %s1 = inlined_call_operand.vmem [shape: f32[1,32], index: 1, kind: input, shape index: {}]
  %s2 = inlined_call_operand.vmem [shape: f32[1,32], index: 2, kind: input, shape index: {}]
  %s3 = inlined_call_operand.hbm [shape: f32[1,32,256], index: 3, kind: input, shape index: {}]
  %s4 = inlined_call_operand.vmem [shape: f32[1,1,256], index: 4, kind: input, shape index: {}]
  %s5 = inlined_call_operand.hbm [shape: f32[1,128,128], index: 5, kind: input, shape index: {}]
  %s6 = inlined_call_operand.vmem [shape: f32[1,128], index: 6, kind: input, shape index: {}]
  %s7 = inlined_call_operand.vmem [shape: f32[16,128], index: 7, kind: output, shape index: {}]
  %s8 = sld [smem:[#allocation0]]
  $region50: #{mlp_pallas_packed.1} parent=0
    _
  %s10 = ssub.s32 1, %s8
  %s11 = scalar_select 0, %s10, %s8
  $region1: #{mlp_pallas_packed.1} parent=0
    #allocation2 [shape = 'u8[8192]{0}', space=vmem, size = 0x2000, scoped, tag = 'input window, operand 0, single buffered']
    #allocation3 [shape = 's32[1]{0}', space=sflag, size = 0x4, scoped, tag = 'scoped memory for mlp_pallas_packed.1']
    #allocation4 [shape = 'u8[32768]{0}', space=vmem, size = 0x8000, scoped, tag = 'input window, operand 3, single buffered']
    #allocation5 [shape = 's32[1]{0}', space=sflag, size = 0x4, scoped, tag = 'scoped memory for mlp_pallas_packed.1']
    #allocation6 [shape = 'u8[65536]{0}', space=vmem, size = 0x10000, scoped, tag = 'input window, operand 5, single buffered']
    %12 = vsyncpa [#allocation3], 0
    %13 = vsyncpa [#allocation5], 0
    // Predicated region
    $region2: #{mlp_pallas_packed.1} parent=1 // pred_check
      _
    $region3: #{mlp_pallas_packed.1} parent=1 // pred_check_branch
      %15 = sbr.rel (0) target = $region5
    $region4: #{mlp_pallas_packed.1} parent=1 // pred_region
      %s17 = ssub.s32 256, 256
      %18 = vsyncadd [#allocation3], %s17
      %s19 = sshll.u32 [#allocation2], 4
      %s20 = int_to_ptr.vmem [resolvable:$true] %s19
      %25 = dma.hbm_to_vmem [thread:$0]  %s0, 256, %s20, [#allocation3], 128, 128, 8
    $region5: #{mlp_pallas_packed.1} parent=1 // pred_fallthru
      _
    // Predicated region
    $region6: #{mlp_pallas_packed.1} parent=1 // pred_check
      _
    $region7: #{mlp_pallas_packed.1} parent=1 // pred_check_branch
      %27 = sbr.rel (0) target = $region9
    $region8: #{mlp_pallas_packed.1} parent=1 // pred_region
      _
    $region9: #{mlp_pallas_packed.1} parent=1 // pred_fallthru
      _
    // Predicated region
    $region10: #{mlp_pallas_packed.1} parent=1 // pred_check
      _
    $region11: #{mlp_pallas_packed.1} parent=1 // pred_check_branch
      %29 = sbr.rel (0) target = $region13
    $region12: #{mlp_pallas_packed.1} parent=1 // pred_region
      _
    $region13: #{mlp_pallas_packed.1} parent=1 // pred_fallthru
      _
    // Predicated region
    $region14: #{mlp_pallas_packed.1} parent=1 // pred_check
      _
    $region15: #{mlp_pallas_packed.1} parent=1 // pred_check_branch
      %31 = sbr.rel (0) target = $region17
    $region16: #{mlp_pallas_packed.1} parent=1 // pred_region
      %s33 = ssub.s32 1024, 1024
      %34 = vsyncadd [#allocation5], %s33
      %s35 = sshll.u32 [#allocation4], 4
      %s36 = int_to_ptr.vmem [resolvable:$true] %s35
      %41 = dma.hbm_to_vmem [thread:$0]  %s3, 1024, %s36, [#allocation5], 256, 256, 16
    $region17: #{mlp_pallas_packed.1} parent=1 // pred_fallthru
      _
    // Predicated region
    $region18: #{mlp_pallas_packed.1} parent=1 // pred_check
      _
    $region19: #{mlp_pallas_packed.1} parent=1 // pred_check_branch
      %43 = sbr.rel (0) target = $region21
    $region20: #{mlp_pallas_packed.1} parent=1 // pred_region
      _
    $region21: #{mlp_pallas_packed.1} parent=1 // pred_fallthru
      _
    // Predicated region
    $region22: #{mlp_pallas_packed.1} parent=1 // pred_check
      _
    $region23: #{mlp_pallas_packed.1} parent=1 // pred_check_branch
      %45 = sbr.rel (0) target = $region25
    $region24: #{mlp_pallas_packed.1} parent=1 // pred_region
      %s47 = ssub.s32 2048, 2048
      %48 = vsyncadd [#allocation5], %s47
      %s49 = sshll.u32 [#allocation6], 4
      %s50 = int_to_ptr.vmem [resolvable:$true] %s49
      %55 = dma.hbm_to_vmem [thread:$0]  %s5, 2048, %s50, [#allocation5], 128, 128, 8
    $region25: #{mlp_pallas_packed.1} parent=1 // pred_fallthru
      _
    // Predicated region
    $region26: #{mlp_pallas_packed.1} parent=1 // pred_check
      _
    $region27: #{mlp_pallas_packed.1} parent=1 // pred_check_branch
      %57 = sbr.rel (0) target = $region29
    $region28: #{mlp_pallas_packed.1} parent=1 // pred_region
      _
    $region29: #{mlp_pallas_packed.1} parent=1 // pred_fallthru
      _
    // Predicated region
    $region30: #{mlp_pallas_packed.1} parent=1 // pred_check
      _
    $region31: #{mlp_pallas_packed.1} parent=1 // pred_check_branch
      %59 = sbr.rel (0) target = $region33
    $region32: #{mlp_pallas_packed.1} parent=1 // pred_region
      %60 = dma.done [#allocation3], 256
    $region33: #{mlp_pallas_packed.1} parent=1 // pred_fallthru
      _
    // Predicated region
    $region34: #{mlp_pallas_packed.1} parent=1 // pred_check
      _
    $region35: #{mlp_pallas_packed.1} parent=1 // pred_check_branch
      %62 = sbr.rel (0) target = $region37
    $region36: #{mlp_pallas_packed.1} parent=1 // pred_region
      %63 = dma.done [#allocation5], 1024
    $region37: #{mlp_pallas_packed.1} parent=1 // pred_fallthru
      _
    // Predicated region
    $region38: #{mlp_pallas_packed.1} parent=1 // pred_check
      _
    $region39: #{mlp_pallas_packed.1} parent=1 // pred_check_branch
      %65 = sbr.rel (0) target = $region41
    $region40: #{mlp_pallas_packed.1} parent=1 // pred_region
      %66 = dma.done [#allocation5], 2048
    $region41: #{mlp_pallas_packed.1} parent=1 // pred_fallthru
      _
    %v67 = vld [vmem:[#allocation2] sm:$0xff]
    %v68 = vld [vmem:[#allocation2 + $0x8] sm:$0xff]
    %vm69 = vcmask 261120
    %v70 = vsel %vm69, %v67, 0.0
    %71 = vadd.xlane.f32.xlu0 %v70
    %v72 = vpop.xlane.xlu0 %71
    %v73 = vsel %vm69, %v68, 0.0
    %74 = vadd.xlane.f32.xlu0 %v73
    %v75 = vpop.xlane.xlu0 %74
    %v76 = vrcp.pop 32.0
    %v77 = vmul.f32 %v72, %v76
    %v78 = vmul.f32 %v75, %v76
    %v79 = vsub.f32 %v67, %v77
    %v80 = vsub.f32 %v68, %v78
    %v81 = vmul.f32 %v79, %v79
    %v82 = vmul.f32 %v80, %v80
    %v83 = vsel %vm69, %v81, 0.0
    %84 = vadd.xlane.f32.xlu0 %v83
    %v85 = vpop.xlane.xlu0 %84
    %v86 = vsel %vm69, %v82, 0.0
    %87 = vadd.xlane.f32.xlu0 %v86
    %v88 = vpop.xlane.xlu0 %87
    %v89 = vmul.f32 %v85, %v76
    %v90 = vmul.f32 %v88, %v76
    %v91 = vadd.f32 %v89, 1e-05
    %v92 = vadd.f32 %v90, 1e-05
    %v93 = vrsqrt.pop %v91
    %v94 = vrsqrt.pop %v92
    %v95 = vmul.f32 %v79, %v93
    %v96 = vmul.f32 %v80, %v94
    %v97 = vld [vmem:[%s1] sm:$0x1]
    %v99 = vlaneseq
    %v100 = vshrl.u32 %v99, 7
    %v101 = vsub.s32 0, %v100
    %v102 = vrot.slane %v97, %v101
    %v104 = vmul.f32 %v95, %v102
    %v105 = vmul.f32 %v96, %v102
    %v106 = vld [vmem:[%s2] sm:$0x1]
    %v108 = vlaneseq
    %v109 = vshrl.u32 %v108, 7
    %v110 = vsub.s32 0, %v109
    %v111 = vrot.slane %v106, %v110
    %v113 = vadd.f32 %v104, %v111
    %v114 = vadd.f32 %v105, %v111
    %v115 = vld [vmem:[#allocation4] sm:$0xff]
    %v116 = vld [vmem:[#allocation4 + $0x8] sm:$0xff]
    %v117 = vld [vmem:[#allocation4 + $0x10] sm:$0xff]
    %v118 = vld [vmem:[#allocation4 + $0x18] sm:$0xff]
    %v119 = vld [vmem:[#allocation4 + $0x20] sm:$0xff]
    %v120 = vld [vmem:[#allocation4 + $0x28] sm:$0xff]
    %v121 = vld [vmem:[#allocation4 + $0x30] sm:$0xff]
    %v122 = vld [vmem:[#allocation4 + $0x38] sm:$0xff]
    %v123 = vld [vmem:[%s4] sm:$0x3]
    %v125 = vlaneseq
    %v126 = vshrl.u32 %v125, 7
    %v127 = vsub.s32 0, %v126
    %v128 = vrot.slane %v123, %v127
    %v129 = vlaneseq
    %v130 = vshrl.u32 %v129, 7
    %v131 = vsub.s32 1, %v130
    %v132 = vrot.slane %v123, %v131
    %v136 = vsel %vm69, %v113, 0
    %v139 = vsel %vm69, %v114, 0
    %141 = vmatprep.subr.mxu0 %v116
    %142 = vmatpush1.msra.mxu0 %v115
    %143 = vmatprep.subr.mxu0 %v118
    %144 = vmatpush1.msra.mxu0 %v117
    %145 = vmatprep.subr.mxu0 %v120
    %146 = vmatpush1.msra.mxu0 %v119
    %147 = vmatprep.subr.mxu0 %v122
    %148 = vmatpush1.msra.mxu0 %v121
    %149 = vmatprep.subr.mxu0 0.0
    %150 = vmatpush1.msra.mxu0 0.0
    %151 = vmatprep.subr.mxu0 0.0
    %152 = vmatpush1.msra.mxu0 0.0
    %153 = vmatprep.subr.mxu0 0.0
    %154 = vmatpush1.msra.mxu0 0.0
    %155 = vmatprep.subr.mxu0 0.0
    %156 = vmatpush1.msra.mxu0 0.0
    %157 = vmatprep.subr.mxu0 0.0
    %158 = vmatpush1.msra.mxu0 0.0
    %159 = vmatprep.subr.mxu0 0.0
    %160 = vmatpush1.msra.mxu0 0.0
    %161 = vmatprep.subr.mxu0 0.0
    %162 = vmatpush1.msra.mxu0 0.0
    %163 = vmatprep.subr.mxu0 0.0
    %164 = vmatpush1.msra.mxu0 0.0
    %165 = vmatprep.subr.mxu0 0.0
    %166 = vmatpush1.msra.mxu0 0.0
    %167 = vmatprep.subr.mxu0 0.0
    %168 = vmatpush1.msra.mxu0 0.0
    %169 = vmatprep.subr.mxu0 0.0
    %170 = vmatpush1.msra.mxu0 0.0
    %171 = vmatprep.subr.mxu0 0.0
    %172 = vmatpush1.msra.mxu0 0.0
    %173 = vmatprep.subr.mxu0 0.0
    %174 = vmatpush1.msra.mxu0 0.0
    %175 = vmatprep.subr.mxu0 0.0
    %176 = vmatpush1.msra.mxu0 0.0
    %177 = vmatprep.subr.mxu0 0.0
    %178 = vmatpush1.msra.mxu0 0.0
    %179 = vmatprep.subr.mxu0 0.0
    %180 = vmatpush1.msra.mxu0 0.0
    %181 = vmatprep.subr.mxu0 0.0
    %182 = vmatpush1.msra.mxu0 0.0
    %183 = vmatprep.subr.mxu0 0.0
    %184 = vmatpush1.msra.mxu0 0.0
    %185 = vmatprep.subr.mxu0 0.0
    %186 = vmatpush1.msra.mxu0 0.0
    %187 = vmatprep.subr.mxu0 0.0
    %188 = vmatpush1.msra.mxu0 0.0
    %189 = vmatprep.subr.mxu0 0.0
    %190 = vmatpush1.msra.mxu0 0.0
    %191 = vmatprep.subr.mxu0 0.0
    %192 = vmatpush1.msra.mxu0 0.0
    %193 = vmatprep.subr.mxu0 0.0
    %194 = vmatpush1.msra.mxu0 0.0
    %195 = vmatprep.subr.mxu0 0.0
    %196 = vmatpush1.msra.mxu0 0.0
    %197 = vmatprep.subr.mxu0 0.0
    %198 = vmatpush1.msra.mxu0 0.0
    %199 = vmatprep.subr.mxu0 0.0
    %200 = vmatpush1.msra.mxu0 0.0
    %201 = vmatprep.subr.mxu0 0.0
    %202 = vmatpush1.msra.mxu0 0.0
    %203 = vmatprep.subr.mxu0 0.0
    %204 = vmatpush1.msra.mxu0 0.0
    %205 = vmatprep.mubr.f32.mxu0 0.0
    %206 = vmatmul.mubr.f32.gmra.mrb[0].mxu0 %v136
    %v207 = vpop.f32.mrb[0].mxu0
    %v208 = vadd.f32 %v128, %v207
    %v209 = vpop.f32.mrb[0].mxu0
    %v210 = vadd.f32 %v132, %v209
    %211 = vmatprep.mubr.f32.mxu0 0.0
    %212 = vmatmul.mubr.f32.gmra.mrb[0].mxu0 %v139
    %v213 = vpop.f32.mrb[0].mxu0
    %v214 = vadd.f32 %v128, %v213
    %v215 = vpop.f32.mrb[0].mxu0
    %v216 = vadd.f32 %v132, %v215
    %217 = vdwg.mxu0
    %v218 = vmax.f32 %v208, 0.0
    %v219 = vmax.f32 %v214, 0.0
    %v220 = vmul.f32 %v218, %v218
    %v221 = vmul.f32 %v219, %v219
    %v222 = vxor.u32 %v210, 2147483648
    %v223 = vxor.u32 %v216, 2147483648
    %v224 = vmul.f32 %v222, 1.442695
    %v225 = vpow.pop %v224
    %v226 = vmul.f32 %v223, 1.442695
    %v227 = vpow.pop %v226
    %v228 = vadd.f32 %v225, 1.0
    %v229 = vadd.f32 %v227, 1.0
    %v230 = vrcp.pop %v228
    %v231 = vmul.f32 1.0, %v230
    %v232 = vrcp.pop %v229
    %v233 = vmul.f32 1.0, %v232
    %v234 = vmul.f32 %v220, %v231
    %v235 = vmul.f32 %v221, %v233
    %v236 = vld [vmem:[#allocation6] sm:$0xff]
    %v237 = vld [vmem:[#allocation6 + $0x8] sm:$0xff]
    %v238 = vld [vmem:[#allocation6 + $0x10] sm:$0xff]
    %v239 = vld [vmem:[#allocation6 + $0x18] sm:$0xff]
    %v240 = vld [vmem:[#allocation6 + $0x20] sm:$0xff]
    %v241 = vld [vmem:[#allocation6 + $0x28] sm:$0xff]
    %v242 = vld [vmem:[#allocation6 + $0x30] sm:$0xff]
    %v243 = vld [vmem:[#allocation6 + $0x38] sm:$0xff]
    %v244 = vld [vmem:[#allocation6 + $0x40] sm:$0xff]
    %v245 = vld [vmem:[#allocation6 + $0x48] sm:$0xff]
    %v246 = vld [vmem:[#allocation6 + $0x50] sm:$0xff]
    %v247 = vld [vmem:[#allocation6 + $0x58] sm:$0xff]
    %v248 = vld [vmem:[#allocation6 + $0x60] sm:$0xff]
    %v249 = vld [vmem:[#allocation6 + $0x68] sm:$0xff]
    %v250 = vld [vmem:[#allocation6 + $0x70] sm:$0xff]
    %v251 = vld [vmem:[#allocation6 + $0x78] sm:$0xff]
    %v252 = vld [vmem:[%s6] sm:$0x1]
    %v254 = vlaneseq
    %v255 = vshrl.u32 %v254, 7
    %v256 = vsub.s32 0, %v255
    %v257 = vrot.slane %v252, %v256
    %259 = vmatprep.subr.mxu0 0.0
    %260 = vmatpush1.msra.mxu0 %v236
    %261 = vmatprep.subr.mxu0 0.0
    %262 = vmatpush1.msra.mxu0 %v237
    %263 = vmatprep.subr.mxu0 0.0
    %264 = vmatpush1.msra.mxu0 %v238
    %265 = vmatprep.subr.mxu0 0.0
    %266 = vmatpush1.msra.mxu0 %v239
    %267 = vmatprep.subr.mxu0 0.0
    %268 = vmatpush1.msra.mxu0 %v240
    %269 = vmatprep.subr.mxu0 0.0
    %270 = vmatpush1.msra.mxu0 %v241
    %271 = vmatprep.subr.mxu0 0.0
    %272 = vmatpush1.msra.mxu0 %v242
    %273 = vmatprep.subr.mxu0 0.0
    %274 = vmatpush1.msra.mxu0 %v243
    %275 = vmatprep.subr.mxu0 0.0
    %276 = vmatpush1.msra.mxu0 %v244
    %277 = vmatprep.subr.mxu0 0.0
    %278 = vmatpush1.msra.mxu0 %v245
    %279 = vmatprep.subr.mxu0 0.0
    %280 = vmatpush1.msra.mxu0 %v246
    %281 = vmatprep.subr.mxu0 0.0
    %282 = vmatpush1.msra.mxu0 %v247
    %283 = vmatprep.subr.mxu0 0.0
    %284 = vmatpush1.msra.mxu0 %v248
    %285 = vmatprep.subr.mxu0 0.0
    %286 = vmatpush1.msra.mxu0 %v249
    %287 = vmatprep.subr.mxu0 0.0
    %288 = vmatpush1.msra.mxu0 %v250
    %289 = vmatprep.subr.mxu0 0.0
    %290 = vmatpush1.msra.mxu0 %v251
    %291 = vmatprep.subr.mxu0 0.0
    %292 = vmatpush1.msra.mxu0 0.0
    %293 = vmatprep.subr.mxu0 0.0
    %294 = vmatpush1.msra.mxu0 0.0
    %295 = vmatprep.subr.mxu0 0.0
    %296 = vmatpush1.msra.mxu0 0.0
    %297 = vmatprep.subr.mxu0 0.0
    %298 = vmatpush1.msra.mxu0 0.0
    %299 = vmatprep.subr.mxu0 0.0
    %300 = vmatpush1.msra.mxu0 0.0
    %301 = vmatprep.subr.mxu0 0.0
    %302 = vmatpush1.msra.mxu0 0.0
    %303 = vmatprep.subr.mxu0 0.0
    %304 = vmatpush1.msra.mxu0 0.0
    %305 = vmatprep.subr.mxu0 0.0
    %306 = vmatpush1.msra.mxu0 0.0
    %307 = vmatprep.subr.mxu0 0.0
    %308 = vmatpush1.msra.mxu0 0.0
    %309 = vmatprep.subr.mxu0 0.0
    %310 = vmatpush1.msra.mxu0 0.0
    %311 = vmatprep.subr.mxu0 0.0
    %312 = vmatpush1.msra.mxu0 0.0
    %313 = vmatprep.subr.mxu0 0.0
    %314 = vmatpush1.msra.mxu0 0.0
    %315 = vmatprep.subr.mxu0 0.0
    %316 = vmatpush1.msra.mxu0 0.0
    %317 = vmatprep.subr.mxu0 0.0
    %318 = vmatpush1.msra.mxu0 0.0
    %319 = vmatprep.subr.mxu0 0.0
    %320 = vmatpush1.msra.mxu0 0.0
    %321 = vmatprep.subr.mxu0 0.0
    %322 = vmatpush1.msra.mxu0 0.0
    %323 = vmatprep.mubr.f32.mxu0 0.0
    %324 = vmatmul.mubr.f32.gmra.mrb[0].mxu0 %v234
    %v325 = vpop.f32.mrb[0].mxu0
    %v326 = vadd.f32 %v257, %v325
    %v327 = vpop.f32.mrb[0].mxu0
    %328 = vmatprep.mubr.f32.mxu0 0.0
    %329 = vmatmul.mubr.f32.gmra.mrb[0].mxu0 %v235
    %v330 = vpop.f32.mrb[0].mxu0
    %v331 = vadd.f32 %v257, %v330
    %v332 = vpop.f32.mrb[0].mxu0
    %333 = vdwg.mxu0
    %334 = vst [vmem:[%s7] sm:$0xff] %v326
    %335 = vst [vmem:[%s7 + $0x8] sm:$0xff] %v331
    // Predicated region
    $region42: #{mlp_pallas_packed.1} parent=1 // pred_check
      _
    $region43: #{mlp_pallas_packed.1} parent=1 // pred_check_branch
      %337 = sbr.rel (0) target = $region45
    $region44: #{mlp_pallas_packed.1} parent=1 // pred_region
      _
    $region45: #{mlp_pallas_packed.1} parent=1 // pred_fallthru
      _
    // Predicated region
    $region46: #{mlp_pallas_packed.1} parent=1 // pred_check
      _
    $region47: #{mlp_pallas_packed.1} parent=1 // pred_check_branch
      %339 = sbr.rel (0) target = $region49
    $region48: #{mlp_pallas_packed.1} parent=1 // pred_region
      _
    $region49: #{mlp_pallas_packed.1} parent=1 // pred_fallthru
      _
    %340 = vsyncpa [#allocation3], 1
    %341 = vsyncpa [#allocation5], 1

</llo_original>
